<compile_context>
chip_gen: v6e
topology: v6e:2x2x1
jax: 0.10.0
libtpu: 0.0.40
codegen_flags: <defaults>
</compile_context>

<pallas_src>
import functools

import jax
import jax.numpy as jnp
from jax.experimental import pallas as pl
from jax.experimental.pallas import tpu as pltpu

DEFAULT_MARGIN = 0.3
_ROW_TILE = 128  # anchor rows per grid step (sublane/lane aligned)


def _triplet_kernel(x_ref, sq_col_ref, sq_row_ref, lab_col_ref, lab_row_ref,
                    ps_ref, cf_ref, *, n_true, margin, row_tile):
    i = pl.program_id(0)
    row0 = pl.multiple_of(i * row_tile, row_tile)

    # (row_tile, D) anchor tile, native dtype straight into the MXU; contraction
    # over the feature dim of both operands (A @ B^T path, no explicit .T).
    x_tile = x_ref[pl.ds(row0, row_tile), :]
    gram = jax.lax.dot_general(
        x_tile, x_ref[...],
        dimension_numbers=(((1,), (1,)), ((), ())),
        preferred_element_type=jnp.float32)                # (row_tile, N_pad) f32

    # Deferred squared distance: scores[i, j] = ||x_j||^2 - 2 <x_i, x_j>.
    # Adding the per-row ||x_i||^2 and taking sqrt are monotone per row, so they
    # are applied after the masked reductions without changing arg-max/arg-min.
    scores = sq_row_ref[...] - 2.0 * gram                   # (row_tile, N_pad)

    same = lab_col_ref[...] == lab_row_ref[...]             # (row_tile, N_pad)
    n_pad = scores.shape[1]
    col_valid = jax.lax.broadcasted_iota(jnp.int32, (1, n_pad), 1) < n_true
    pos_mask = same & col_valid
    neg_mask = jnp.logical_not(same) & col_valid

    neg_big = jnp.float32(-1e30)
    pos_big = jnp.float32(1e30)
    ap_score = jnp.max(jnp.where(pos_mask, scores, neg_big), axis=1, keepdims=True)
    an_score = jnp.min(jnp.where(neg_mask, scores, pos_big), axis=1, keepdims=True)

    sq_i = sq_col_ref[...]                                   # (row_tile, 1) f32
    dist_ap = jnp.sqrt(jnp.maximum(ap_score + sq_i, 1e-12))  # 2N sqrts total
    dist_an = jnp.sqrt(jnp.maximum(an_score + sq_i, 1e-12))

    row_idx = row0 + jax.lax.broadcasted_iota(jnp.int32, (row_tile, 1), 0)
    row_valid = row_idx < n_true

    per_sample = jnp.maximum(dist_ap - dist_an + jnp.float32(margin), 0.0)
    ps_ref[...] = jnp.where(row_valid, per_sample, 0.0)
    cf_ref[...] = (row_valid & (dist_an >= dist_ap)).astype(jnp.int32)


def ori_triplet_loss(inputs, targets, margin=DEFAULT_MARGIN):
    """inputs: (N, D) float, targets: (N,) int -> (loss f32 scalar, correct i32 scalar)."""
    n, d = inputs.shape
    tm = _ROW_TILE
    n_pad = ((n + tm - 1) // tm) * tm            # lane/sublane aligned batch
    d_pad = ((d + 127) // 128) * 128             # lane-aligned feature dim

    x = jnp.pad(inputs, ((0, n_pad - n), (0, d_pad - d)))
    lab = jnp.pad(targets.astype(jnp.int32), (0, n_pad - n))

    # ||x||^2 in f32, provided in both column and row layouts so the kernel
    # never needs a cross-lane transpose of a 1-D vector.
    xf = x.astype(jnp.float32)
    sq = jnp.sum(xf * xf, axis=1)
    sq_col = sq.reshape(n_pad, 1)
    sq_row = sq.reshape(1, n_pad)
    lab_col = lab.reshape(n_pad, 1)
    lab_row = lab.reshape(1, n_pad)

    grid = (n_pad // tm,)
    kernel = functools.partial(_triplet_kernel, n_true=n, margin=float(margin),
                               row_tile=tm)
    bytes_accessed = (x.size * x.dtype.itemsize          # features
                      + 4 * (4 * n_pad)                  # sq/labels vectors
                      + 2 * (4 * n_pad))                 # per-row outputs

    per_sample, correct_flags = pl.pallas_call(
        kernel,
        out_shape=(jax.ShapeDtypeStruct((n_pad, 1), jnp.float32),
                   jax.ShapeDtypeStruct((n_pad, 1), jnp.int32)),
        grid=grid,
        in_specs=[
            pl.BlockSpec((n_pad, d_pad), lambda i: (0, 0)),   # x (resident, all cols)
            pl.BlockSpec((tm, 1), lambda i: (i, 0)),          # ||x_i||^2 row tile
            pl.BlockSpec((1, n_pad), lambda i: (0, 0)),       # ||x_j||^2 row vector
            pl.BlockSpec((tm, 1), lambda i: (i, 0)),          # labels (anchor tile)
            pl.BlockSpec((1, n_pad), lambda i: (0, 0)),       # labels (row vector)
        ],
        out_specs=(
            pl.BlockSpec((tm, 1), lambda i: (i, 0)),
            pl.BlockSpec((tm, 1), lambda i: (i, 0)),
        ),
        compiler_params=pltpu.CompilerParams(dimension_semantics=("parallel",)),
        cost_estimate=pl.CostEstimate(
            flops=2 * n_pad * n_pad * d_pad,
            transcendentals=2 * n_pad,
            bytes_accessed=bytes_accessed),
    )(x, sq_col, sq_row, lab_col, lab_row)

    loss = jnp.sum(per_sample) / jnp.float32(n)
    correct = jnp.sum(correct_flags)
    return loss, correct


def _reference(inputs, targets, margin=DEFAULT_MARGIN):
    """Pure-JAX transcription of the PyTorch forward (for validation)."""
    x = inputs.astype(jnp.float32)
    sq = jnp.sum(x * x, axis=1, keepdims=True)
    dist2 = sq + sq.T - 2.0 * (x @ x.T)
    dist = jnp.sqrt(jnp.maximum(dist2, 1e-12))
    mask = targets[:, None] == targets[None, :]
    dist_ap = jnp.max(jnp.where(mask, dist, -jnp.inf), axis=1)
    dist_an = jnp.min(jnp.where(mask, jnp.inf, dist), axis=1)
    loss = jnp.mean(jnp.maximum(dist_ap - dist_an + margin, 0.0))
    correct = jnp.sum(dist_an >= dist_ap)
    return loss, correct


if __name__ == "__main__":
    key = jax.random.PRNGKey(0)
    N, D = 8, 32  # small batch / feat_dim consistent with the module's forward
    x = jax.random.normal(key, (N, D), dtype=jnp.float32)
    # 4 identities x 2 samples each, so every anchor has a positive and a negative.
    targets = jnp.array([0, 0, 1, 1, 2, 2, 3, 3], dtype=jnp.int32)

    loss, correct = ori_triplet_loss(x, targets)
    jax.block_until_ready((loss, correct))

    ref_loss, ref_correct = _reference(x, targets)
    assert abs(float(loss) - float(ref_loss)) < 1e-4, (float(loss), float(ref_loss))
    assert int(correct) == int(ref_correct), (int(correct), int(ref_correct))
    print("KERNEL_OK")
</pallas_src>

<mosaic_0001>
module attributes {stable_mosaic.version = 11 : i64} {
  func.func @_triplet_kernel(%arg0: i32, %arg1: memref<128x128xf32, #tpu.memory_space<vmem>>, %arg2: memref<128x1xf32, #tpu.memory_space<vmem>>, %arg3: memref<1x128xf32, #tpu.memory_space<vmem>>, %arg4: memref<128x1xi32, #tpu.memory_space<vmem>>, %arg5: memref<1x128xi32, #tpu.memory_space<vmem>>, %arg6: memref<128x1xf32, #tpu.memory_space<vmem>>, %arg7: memref<128x1xi32, #tpu.memory_space<vmem>>) attributes {dimension_semantics = [#tpu.dimension_semantics<parallel>], iteration_bounds = array<i64: 1>, scalar_prefetch = 0 : i64, scratch_operands = 0 : i64, tpu.core_type = #tpu.core_type<tc>, window_params = [{pipeline_mode = #tpu.pipeline_mode<synchronous>, transform_indices = @transform_0, window_bounds = array<i64: 128, 128>}, {transform_indices = @transform_1, window_bounds = array<i64: 128, 1>}, {pipeline_mode = #tpu.pipeline_mode<synchronous>, transform_indices = @transform_2, window_bounds = array<i64: 1, 128>}, {transform_indices = @transform_3, window_bounds = array<i64: 128, 1>}, {pipeline_mode = #tpu.pipeline_mode<synchronous>, transform_indices = @transform_4, window_bounds = array<i64: 1, 128>}, {transform_indices = @transform_5, window_bounds = array<i64: 128, 1>}, {transform_indices = @transform_6, window_bounds = array<i64: 128, 1>}]} {
    %c128_i32 = arith.constant 128 : i32
    %0 = arith.muli %arg0, %c128_i32 : i32
    %1 = tpu.assume_multiple %0, 128 : i32
    %2 = arith.index_cast %1 : i32 to index
    %c0 = arith.constant 0 : index
    %3 = vector.load %arg1[%2, %c0] : memref<128x128xf32, #tpu.memory_space<vmem>>, vector<128x128xf32>
    %c0_0 = arith.constant 0 : index
    %c0_1 = arith.constant 0 : index
    %4 = vector.load %arg1[%c0_0, %c0_1] : memref<128x128xf32, #tpu.memory_space<vmem>>, vector<128x128xf32>
    %cst = arith.constant dense<0.000000e+00> : vector<128x128xf32>
    %5 = tpu.matmul %3, %4, %cst {dimension_numbers = #tpu.dot_dimension_numbers<[1], [1], [0], [0], [0, 0, 1, 0], [], []>} : vector<128x128xf32>, vector<128x128xf32>, vector<128x128xf32> -> vector<128x128xf32>
    %c0_2 = arith.constant 0 : index
    %c0_3 = arith.constant 0 : index
    %6 = vector.load %arg3[%c0_2, %c0_3] : memref<1x128xf32, #tpu.memory_space<vmem>>, vector<1x128xf32>
    %cst_4 = arith.constant 2.000000e+00 : f32
    %7 = vector.broadcast %cst_4 : f32 to vector<128x128xf32>
    %8 = arith.mulf %7, %5 : vector<128x128xf32>
    %9 = vector.broadcast %6 : vector<1x128xf32> to vector<128x128xf32>
    %10 = arith.subf %9, %8 : vector<128x128xf32>
    %c0_5 = arith.constant 0 : index
    %c0_6 = arith.constant 0 : index
    %11 = vector.load %arg4[%c0_5, %c0_6] : memref<128x1xi32, #tpu.memory_space<vmem>>, vector<128x1xi32>
    %c0_7 = arith.constant 0 : index
    %c0_8 = arith.constant 0 : index
    %12 = vector.load %arg5[%c0_7, %c0_8] : memref<1x128xi32, #tpu.memory_space<vmem>>, vector<1x128xi32>
    %13 = vector.broadcast %11 : vector<128x1xi32> to vector<128x128xi32>
    %14 = vector.broadcast %12 : vector<1x128xi32> to vector<128x128xi32>
    %15 = arith.cmpi eq, %13, %14 : vector<128x128xi32>
    %16 = tpu.iota {dimensions = array<i32: 1>} : vector<1x128xi32>
    %c8_i32 = arith.constant 8 : i32
    %17 = vector.broadcast %c8_i32 : i32 to vector<1x128xi32>
    %18 = arith.cmpi slt, %16, %17 : vector<1x128xi32>
    %19 = vector.broadcast %18 : vector<1x128xi1> to vector<128x128xi1>
    %20 = arith.andi %15, %19 : vector<128x128xi1>
    %cst_9 = arith.constant dense<true> : vector<128x128xi1>
    %21 = arith.xori %15, %cst_9 : vector<128x128xi1>
    %22 = vector.broadcast %18 : vector<1x128xi1> to vector<128x128xi1>
    %23 = arith.andi %21, %22 : vector<128x128xi1>
    %cst_10 = arith.constant -1.000000e+30 : f32
    %24 = vector.broadcast %cst_10 : f32 to vector<128x128xf32>
    %25 = arith.select %20, %10, %24 : vector<128x128xi1>, vector<128x128xf32>
    %cst_11 = arith.constant dense<0xFF800000> : vector<128xf32>
    %26 = vector.multi_reduction <maximumf>, %25, %cst_11 [1] : vector<128x128xf32> to vector<128xf32>
    %27 = vector.shape_cast %26 : vector<128xf32> to vector<128x1xf32>
    %cst_12 = arith.constant 1.000000e+30 : f32
    %28 = vector.broadcast %cst_12 : f32 to vector<128x128xf32>
    %29 = arith.select %23, %10, %28 : vector<128x128xi1>, vector<128x128xf32>
    %cst_13 = arith.constant dense<0x7F800000> : vector<128xf32>
    %30 = vector.multi_reduction <minimumf>, %29, %cst_13 [1] : vector<128x128xf32> to vector<128xf32>
    %31 = vector.shape_cast %30 : vector<128xf32> to vector<128x1xf32>
    %c0_14 = arith.constant 0 : index
    %c0_15 = arith.constant 0 : index
    %32 = vector.load %arg2[%c0_14, %c0_15] : memref<128x1xf32, #tpu.memory_space<vmem>>, vector<128x1xf32>
    %33 = arith.addf %27, %32 : vector<128x1xf32>
    %cst_16 = arith.constant 9.99999996E-13 : f32
    %34 = vector.broadcast %cst_16 : f32 to vector<128x1xf32>
    %35 = arith.maximumf %33, %34 : vector<128x1xf32>
    %36 = math.sqrt %35 : vector<128x1xf32>
    %37 = arith.addf %31, %32 : vector<128x1xf32>
    %cst_17 = arith.constant 9.99999996E-13 : f32
    %38 = vector.broadcast %cst_17 : f32 to vector<128x1xf32>
    %39 = arith.maximumf %37, %38 : vector<128x1xf32>
    %40 = math.sqrt %39 : vector<128x1xf32>
    %41 = tpu.iota {dimensions = array<i32: 0>} : vector<128x1xi32>
    %42 = vector.broadcast %1 : i32 to vector<128x1xi32>
    %43 = arith.addi %42, %41 : vector<128x1xi32>
    %c8_i32_18 = arith.constant 8 : i32
    %44 = vector.broadcast %c8_i32_18 : i32 to vector<128x1xi32>
    %45 = arith.cmpi slt, %43, %44 : vector<128x1xi32>
    %46 = arith.subf %36, %40 : vector<128x1xf32>
    %cst_19 = arith.constant 3.000000e-01 : f32
    %47 = vector.broadcast %cst_19 : f32 to vector<128x1xf32>
    %48 = arith.addf %46, %47 : vector<128x1xf32>
    %cst_20 = arith.constant 0.000000e+00 : f32
    %49 = vector.broadcast %cst_20 : f32 to vector<128x1xf32>
    %50 = arith.maximumf %48, %49 : vector<128x1xf32>
    %cst_21 = arith.constant 0.000000e+00 : f32
    %51 = vector.broadcast %cst_21 : f32 to vector<128x1xf32>
    %52 = arith.select %45, %50, %51 : vector<128x1xi1>, vector<128x1xf32>
    %c0_22 = arith.constant 0 : index
    %c0_23 = arith.constant 0 : index
    %53 = vector.load %arg6[%c0_22, %c0_23] : memref<128x1xf32, #tpu.memory_space<vmem>>, vector<128x1xf32>
    tpu.vector_store %arg6[%c0_22, %c0_23], %52 {strides = array<i32>} : memref<128x1xf32, #tpu.memory_space<vmem>>, vector<128x1xf32>,
    %54 = arith.cmpf oge, %40, %36 : vector<128x1xf32>
    %55 = arith.andi %45, %54 : vector<128x1xi1>
    %56 = arith.extui %55 : vector<128x1xi1> to vector<128x1xi32>
    %c0_24 = arith.constant 0 : index
    %c0_25 = arith.constant 0 : index
    %57 = vector.load %arg7[%c0_24, %c0_25] : memref<128x1xi32, #tpu.memory_space<vmem>>, vector<128x1xi32>
    tpu.vector_store %arg7[%c0_24, %c0_25], %56 {strides = array<i32>} : memref<128x1xi32, #tpu.memory_space<vmem>>, vector<128x1xi32>,
    return
  }
  func.func @transform_0(%arg0: i32) -> (i32, i32) {
    %c0_i32 = arith.constant 0 : i32
    %c0_i32_0 = arith.constant 0 : i32
    %c0_i32_1 = arith.constant 0 : i32
    return %c0_i32, %c0_i32_0 : i32, i32
  }
  func.func @transform_1(%arg0: i32) -> (i32, i32) {
    %c0_i32 = arith.constant 0 : i32
    %c0_i32_0 = arith.constant 0 : i32
    return %arg0, %c0_i32 : i32, i32
  }
  func.func @transform_2(%arg0: i32) -> (i32, i32) {
    %c0_i32 = arith.constant 0 : i32
    %c0_i32_0 = arith.constant 0 : i32
    %c0_i32_1 = arith.constant 0 : i32
    return %c0_i32, %c0_i32_0 : i32, i32
  }
  func.func @transform_3(%arg0: i32) -> (i32, i32) {
    %c0_i32 = arith.constant 0 : i32
    %c0_i32_0 = arith.constant 0 : i32
    return %arg0, %c0_i32 : i32, i32
  }
  func.func @transform_4(%arg0: i32) -> (i32, i32) {
    %c0_i32 = arith.constant 0 : i32
    %c0_i32_0 = arith.constant 0 : i32
    %c0_i32_1 = arith.constant 0 : i32
    return %c0_i32, %c0_i32_0 : i32, i32
  }
  func.func @transform_5(%arg0: i32) -> (i32, i32) {
    %c0_i32 = arith.constant 0 : i32
    %c0_i32_0 = arith.constant 0 : i32
    return %arg0, %c0_i32 : i32, i32
  }
  func.func @transform_6(%arg0: i32) -> (i32, i32) {
    %c0_i32 = arith.constant 0 : i32
    %c0_i32_0 = arith.constant 0 : i32
    return %arg0, %c0_i32 : i32, i32
  }
}

</mosaic_0001>

<llo_original>
// kernel: tpu_custom_call.1
$region0: #{tpu_custom_call.1}
  #allocation0 [shape = 'u32[]', space=smem, size = 0x4, offset = 0x4, fixed_abs, tag = 'smem constant byte address 0x4 - core index']
  #allocation1 [shape = 'u32[144,128]{1,0:T(1,128)}', space=vmem, size = 0x12000, scoped, tag = 'internal scratch']
  %s0 = inlined_call_operand.vmem [shape: f32[128,128], index: 0, kind: input, shape index: {}]
  %s1 = inlined_call_operand.vmem [shape: f32[128,1], index: 1, kind: input, shape index: {}]
  %s2 = inlined_call_operand.vmem [shape: f32[1,128], index: 2, kind: input, shape index: {}]
  %s3 = inlined_call_operand.vmem [shape: s32[128,1], index: 3, kind: input, shape index: {}]
  %s4 = inlined_call_operand.vmem [shape: s32[1,128], index: 4, kind: input, shape index: {}]
  %s5 = inlined_call_operand.vmem [shape: f32[128,1], index: 5, kind: output, shape index: {0}]
  %s6 = inlined_call_operand.vmem [shape: s32[128,1], index: 6, kind: output, shape index: {1}]
  %7 = xla_tuple %s5, %s6
  %s8 = sld [smem:[#allocation0]]
  $region38: #{tpu_custom_call.1} parent=0
    _
  %s10 = ssub.s32 1, %s8
  %s11 = scalar_select 0, %s10, %s8
  // Predicated region
  $region2: #{tpu_custom_call.1} parent=0 // pred_check
    _
  $region3: #{tpu_custom_call.1} parent=0 // pred_check_branch
    %13 = sbr.rel (0) target = $region5
  $region4: #{tpu_custom_call.1} parent=0 // pred_region
    _
  $region5: #{tpu_custom_call.1} parent=0 // pred_fallthru
    _
  // Predicated region
  $region6: #{tpu_custom_call.1} parent=0 // pred_check
    _
  $region7: #{tpu_custom_call.1} parent=0 // pred_check_branch
    %15 = sbr.rel (0) target = $region9
  $region8: #{tpu_custom_call.1} parent=0 // pred_region
    _
  $region9: #{tpu_custom_call.1} parent=0 // pred_fallthru
    _
  // Predicated region
  $region10: #{tpu_custom_call.1} parent=0 // pred_check
    _
  $region11: #{tpu_custom_call.1} parent=0 // pred_check_branch
    %17 = sbr.rel (0) target = $region13
  $region12: #{tpu_custom_call.1} parent=0 // pred_region
    _
  $region13: #{tpu_custom_call.1} parent=0 // pred_fallthru
    _
  // Predicated region
  $region14: #{tpu_custom_call.1} parent=0 // pred_check
    _
  $region15: #{tpu_custom_call.1} parent=0 // pred_check_branch
    %19 = sbr.rel (0) target = $region17
  $region16: #{tpu_custom_call.1} parent=0 // pred_region
    _
  $region17: #{tpu_custom_call.1} parent=0 // pred_fallthru
    _
  // Predicated region
  $region18: #{tpu_custom_call.1} parent=0 // pred_check
    _
  $region19: #{tpu_custom_call.1} parent=0 // pred_check_branch
    %21 = sbr.rel (0) target = $region21
  $region20: #{tpu_custom_call.1} parent=0 // pred_region
    _
  $region21: #{tpu_custom_call.1} parent=0 // pred_fallthru
    _
  %s22 = smul.u32 0, 128
  %s23 = scalar_lea.vmem %s0, %s22
  %v24 = vld [vmem:[%s23] sm:$0xff]
  %v25 = vld [vmem:[%s23 + $0x8] sm:$0xff]
  %v26 = vld [vmem:[%s23 + $0x10] sm:$0xff]
  %v27 = vld [vmem:[%s23 + $0x18] sm:$0xff]
  %v28 = vld [vmem:[%s23 + $0x20] sm:$0xff]
  %v29 = vld [vmem:[%s23 + $0x28] sm:$0xff]
  %v30 = vld [vmem:[%s23 + $0x30] sm:$0xff]
  %v31 = vld [vmem:[%s23 + $0x38] sm:$0xff]
  %v32 = vld [vmem:[%s23 + $0x40] sm:$0xff]
  %v33 = vld [vmem:[%s23 + $0x48] sm:$0xff]
  %v34 = vld [vmem:[%s23 + $0x50] sm:$0xff]
  %v35 = vld [vmem:[%s23 + $0x58] sm:$0xff]
  %v36 = vld [vmem:[%s23 + $0x60] sm:$0xff]
  %v37 = vld [vmem:[%s23 + $0x68] sm:$0xff]
  %v38 = vld [vmem:[%s23 + $0x70] sm:$0xff]
  %v39 = vld [vmem:[%s23 + $0x78] sm:$0xff]
  %v40 = vld [vmem:[%s0] sm:$0xff]
  %v41 = vld [vmem:[%s0 + $0x8] sm:$0xff]
  %v42 = vld [vmem:[%s0 + $0x10] sm:$0xff]
  %v43 = vld [vmem:[%s0 + $0x18] sm:$0xff]
  %v44 = vld [vmem:[%s0 + $0x20] sm:$0xff]
  %v45 = vld [vmem:[%s0 + $0x28] sm:$0xff]
  %v46 = vld [vmem:[%s0 + $0x30] sm:$0xff]
  %v47 = vld [vmem:[%s0 + $0x38] sm:$0xff]
  %v48 = vld [vmem:[%s0 + $0x40] sm:$0xff]
  %v49 = vld [vmem:[%s0 + $0x48] sm:$0xff]
  %v50 = vld [vmem:[%s0 + $0x50] sm:$0xff]
  %v51 = vld [vmem:[%s0 + $0x58] sm:$0xff]
  %v52 = vld [vmem:[%s0 + $0x60] sm:$0xff]
  %v53 = vld [vmem:[%s0 + $0x68] sm:$0xff]
  %v54 = vld [vmem:[%s0 + $0x70] sm:$0xff]
  %v55 = vld [vmem:[%s0 + $0x78] sm:$0xff]
  %56 = vmatprep.subr.mxu0 0.0
  %57 = vmatpush1.xpose.msra.mxu0 %v55
  %58 = vmatprep.subr.mxu0 0.0
  %59 = vmatpush1.xpose.msra.mxu0 %v54
  %60 = vmatprep.subr.mxu0 0.0
  %61 = vmatpush1.xpose.msra.mxu0 %v53
  %62 = vmatprep.subr.mxu0 0.0
  %63 = vmatpush1.xpose.msra.mxu0 %v52
  %64 = vmatprep.subr.mxu0 0.0
  %65 = vmatpush1.xpose.msra.mxu0 %v51
  %66 = vmatprep.subr.mxu0 0.0
  %67 = vmatpush1.xpose.msra.mxu0 %v50
  %68 = vmatprep.subr.mxu0 0.0
  %69 = vmatpush1.xpose.msra.mxu0 %v49
  %70 = vmatprep.subr.mxu0 0.0
  %71 = vmatpush1.xpose.msra.mxu0 %v48
  %72 = vmatprep.subr.mxu0 0.0
  %73 = vmatpush1.xpose.msra.mxu0 %v47
  %74 = vmatprep.subr.mxu0 0.0
  %75 = vmatpush1.xpose.msra.mxu0 %v46
  %76 = vmatprep.subr.mxu0 0.0
  %77 = vmatpush1.xpose.msra.mxu0 %v45
  %78 = vmatprep.subr.mxu0 0.0
  %79 = vmatpush1.xpose.msra.mxu0 %v44
  %80 = vmatprep.subr.mxu0 0.0
  %81 = vmatpush1.xpose.msra.mxu0 %v43
  %82 = vmatprep.subr.mxu0 0.0
  %83 = vmatpush1.xpose.msra.mxu0 %v42
  %84 = vmatprep.subr.mxu0 0.0
  %85 = vmatpush1.xpose.msra.mxu0 %v41
  %86 = vmatprep.subr.mxu0 0.0
  %87 = vmatpush1.xpose.msra.mxu0 %v40
  %88 = vmatprep.subr.mxu0 0.0
  %89 = vmatpush2.xpose.msra.mxu0 0.0
  %90 = vmatprep.subr.mxu0 0.0
  %91 = vmatpush2.xpose.msra.mxu0 0.0
  %92 = vmatprep.subr.mxu0 0.0
  %93 = vmatpush2.xpose.msra.mxu0 0.0
  %94 = vmatprep.subr.mxu0 0.0
  %95 = vmatpush2.xpose.msra.mxu0 0.0
  %96 = vmatprep.subr.mxu0 0.0
  %97 = vmatpush2.xpose.msra.mxu0 0.0
  %98 = vmatprep.subr.mxu0 0.0
  %99 = vmatpush2.xpose.msra.mxu0 0.0
  %100 = vmatprep.subr.mxu0 0.0
  %101 = vmatpush2.xpose.msra.mxu0 0.0
  %102 = vmatprep.subr.mxu0 0.0
  %103 = vmatpush2.xpose.msra.mxu0 0.0
  %104 = vmatprep.subr.mxu0 0.0
  %105 = vmatpush2.xpose.msra.mxu0 0.0
  %106 = vmatprep.subr.mxu0 0.0
  %107 = vmatpush2.xpose.msra.mxu0 0.0
  %108 = vmatprep.subr.mxu0 0.0
  %109 = vmatpush2.xpose.msra.mxu0 0.0
  %110 = vmatprep.subr.mxu0 0.0
  %111 = vmatpush2.xpose.msra.mxu0 0.0
  %112 = vmatprep.subr.mxu0 0.0
  %113 = vmatpush2.xpose.msra.mxu0 0.0
  %114 = vmatprep.subr.mxu0 0.0
  %115 = vmatpush2.xpose.msra.mxu0 0.0
  %116 = vmatprep.subr.mxu0 0.0
  %117 = vmatpush2.xpose.msra.mxu0 0.0
  %118 = vmatprep.subr.mxu0 0.0
  %119 = vmatpush2.xpose.msra.mxu0 0.0
  %120 = vmatprep.mubr.f32.mxu0 0.0
  %121 = vmatmul.mubr.f32.gmra.mxu0 %v24
  %v122 = vpop.f32.mrf.mxu0
  %v123 = vadd.f32 0.0, %v122
  %v124 = vpop.f32.mrf.mxu0
  %125 = vmatprep.mubr.f32.mxu0 0.0
  %126 = vmatmul.mubr.f32.gmra.mxu0 %v25
  %v127 = vpop.f32.mrf.mxu0
  %v128 = vadd.f32 0.0, %v127
  %v129 = vpop.f32.mrf.mxu0
  %130 = vmatprep.mubr.f32.mxu0 0.0
  %131 = vmatmul.mubr.f32.gmra.mxu0 %v26
  %v132 = vpop.f32.mrf.mxu0
  %v133 = vadd.f32 0.0, %v132
  %v134 = vpop.f32.mrf.mxu0
  %135 = vmatprep.mubr.f32.mxu0 0.0
  %136 = vmatmul.mubr.f32.gmra.mxu0 %v27
  %v137 = vpop.f32.mrf.mxu0
  %v138 = vadd.f32 0.0, %v137
  %v139 = vpop.f32.mrf.mxu0
  %140 = vmatprep.mubr.f32.mxu0 0.0
  %141 = vmatmul.mubr.f32.gmra.mxu0 %v28
  %v142 = vpop.f32.mrf.mxu0
  %v143 = vadd.f32 0.0, %v142
  %v144 = vpop.f32.mrf.mxu0
  %145 = vmatprep.mubr.f32.mxu0 0.0
  %146 = vmatmul.mubr.f32.gmra.mxu0 %v29
  %v147 = vpop.f32.mrf.mxu0
  %v148 = vadd.f32 0.0, %v147
  %v149 = vpop.f32.mrf.mxu0
  %150 = vmatprep.mubr.f32.mxu0 0.0
  %151 = vmatmul.mubr.f32.gmra.mxu0 %v30
  %v152 = vpop.f32.mrf.mxu0
  %v153 = vadd.f32 0.0, %v152
  %v154 = vpop.f32.mrf.mxu0
  %155 = vmatprep.mubr.f32.mxu0 0.0
  %156 = vmatmul.mubr.f32.gmra.mxu0 %v31
  %v157 = vpop.f32.mrf.mxu0
  %v158 = vadd.f32 0.0, %v157
  %v159 = vpop.f32.mrf.mxu0
  %160 = vmatprep.mubr.f32.mxu0 0.0
  %161 = vmatmul.mubr.f32.gmra.mxu0 %v32
  %v162 = vpop.f32.mrf.mxu0
  %v163 = vadd.f32 0.0, %v162
  %v164 = vpop.f32.mrf.mxu0
  %165 = vmatprep.mubr.f32.mxu0 0.0
  %166 = vmatmul.mubr.f32.gmra.mxu0 %v33
  %v167 = vpop.f32.mrf.mxu0
  %v168 = vadd.f32 0.0, %v167
  %v169 = vpop.f32.mrf.mxu0
  %170 = vmatprep.mubr.f32.mxu0 0.0
  %171 = vmatmul.mubr.f32.gmra.mxu0 %v34
  %v172 = vpop.f32.mrf.mxu0
  %v173 = vadd.f32 0.0, %v172
  %v174 = vpop.f32.mrf.mxu0
  %175 = vmatprep.mubr.f32.mxu0 0.0
  %176 = vmatmul.mubr.f32.gmra.mxu0 %v35
  %v177 = vpop.f32.mrf.mxu0
  %v178 = vadd.f32 0.0, %v177
  %v179 = vpop.f32.mrf.mxu0
  %180 = vmatprep.mubr.f32.mxu0 0.0
  %181 = vmatmul.mubr.f32.gmra.mxu0 %v36
  %v182 = vpop.f32.mrf.mxu0
  %v183 = vadd.f32 0.0, %v182
  %v184 = vpop.f32.mrf.mxu0
  %185 = vmatprep.mubr.f32.mxu0 0.0
  %186 = vmatmul.mubr.f32.gmra.mxu0 %v37
  %v187 = vpop.f32.mrf.mxu0
  %v188 = vadd.f32 0.0, %v187
  %v189 = vpop.f32.mrf.mxu0
  %190 = vmatprep.mubr.f32.mxu0 0.0
  %191 = vmatmul.mubr.f32.gmra.mxu0 %v38
  %v192 = vpop.f32.mrf.mxu0
  %v193 = vadd.f32 0.0, %v192
  %v194 = vpop.f32.mrf.mxu0
  %195 = vmatprep.mubr.f32.mxu0 0.0
  %196 = vmatmul.mubr.f32.gmra.mxu0 %v39
  %v197 = vpop.f32.mrf.mxu0
  %v198 = vadd.f32 0.0, %v197
  %v199 = vpop.f32.mrf.mxu0
  %200 = vdwg.mxu0
  %v201 = vld [vmem:[%s2] sm:$0x1]
  %v202 = vmul.f32 %v123, 2.0
  %v203 = vmul.f32 %v128, 2.0
  %v204 = vmul.f32 %v133, 2.0
  %v205 = vmul.f32 %v138, 2.0
  %v206 = vmul.f32 %v143, 2.0
  %v207 = vmul.f32 %v148, 2.0
  %v208 = vmul.f32 %v153, 2.0
  %v209 = vmul.f32 %v158, 2.0
  %v210 = vmul.f32 %v163, 2.0
  %v211 = vmul.f32 %v168, 2.0
  %v212 = vmul.f32 %v173, 2.0
  %v213 = vmul.f32 %v178, 2.0
  %v214 = vmul.f32 %v183, 2.0
  %v215 = vmul.f32 %v188, 2.0
  %v216 = vmul.f32 %v193, 2.0
  %v217 = vmul.f32 %v198, 2.0
  %v219 = vlaneseq
  %v220 = vshrl.u32 %v219, 7
  %v221 = vsub.s32 0, %v220
  %v222 = vrot.slane %v201, %v221
  %v224 = vsub.f32 %v222, %v202
  %v225 = vsub.f32 %v222, %v203
  %v226 = vsub.f32 %v222, %v204
  %v227 = vsub.f32 %v222, %v205
  %v228 = vsub.f32 %v222, %v206
  %v229 = vsub.f32 %v222, %v207
  %v230 = vsub.f32 %v222, %v208
  %v231 = vsub.f32 %v222, %v209
  %v232 = vsub.f32 %v222, %v210
  %v233 = vsub.f32 %v222, %v211
  %v234 = vsub.f32 %v222, %v212
  %v235 = vsub.f32 %v222, %v213
  %v236 = vsub.f32 %v222, %v214
  %v237 = vsub.f32 %v222, %v215
  %v238 = vsub.f32 %v222, %v216
  %v239 = vsub.f32 %v222, %v217
  %v240 = vld [vmem:[%s3] sm:$0xff]
  %v241 = vld [vmem:[%s3 + $0x8] sm:$0xff]
  %v242 = vld [vmem:[%s3 + $0x10] sm:$0xff]
  %v243 = vld [vmem:[%s3 + $0x18] sm:$0xff]
  %v244 = vld [vmem:[%s3 + $0x20] sm:$0xff]
  %v245 = vld [vmem:[%s3 + $0x28] sm:$0xff]
  %v246 = vld [vmem:[%s3 + $0x30] sm:$0xff]
  %v247 = vld [vmem:[%s3 + $0x38] sm:$0xff]
  %v248 = vld [vmem:[%s3 + $0x40] sm:$0xff]
  %v249 = vld [vmem:[%s3 + $0x48] sm:$0xff]
  %v250 = vld [vmem:[%s3 + $0x50] sm:$0xff]
  %v251 = vld [vmem:[%s3 + $0x58] sm:$0xff]
  %v252 = vld [vmem:[%s3 + $0x60] sm:$0xff]
  %v253 = vld [vmem:[%s3 + $0x68] sm:$0xff]
  %v254 = vld [vmem:[%s3 + $0x70] sm:$0xff]
  %v255 = vld [vmem:[%s3 + $0x78] sm:$0xff]
  %v256 = vld [vmem:[%s4] sm:$0x1]
  %257 = vset.pattern.permute.xlu0 0
  %258 = vperm.xlu0 %257, %v240
  %v259 = vpop.permute.xlu0 %258
  %260 = vset.pattern.permute.xlu0 0
  %261 = vperm.xlu0 %260, %v241
  %v262 = vpop.permute.xlu0 %261
  %263 = vset.pattern.permute.xlu0 0
  %264 = vperm.xlu0 %263, %v242
  %v265 = vpop.permute.xlu0 %264
  %266 = vset.pattern.permute.xlu0 0
  %267 = vperm.xlu0 %266, %v243
  %v268 = vpop.permute.xlu0 %267
  %269 = vset.pattern.permute.xlu0 0
  %270 = vperm.xlu0 %269, %v244
  %v271 = vpop.permute.xlu0 %270
  %272 = vset.pattern.permute.xlu0 0
  %273 = vperm.xlu0 %272, %v245
  %v274 = vpop.permute.xlu0 %273
  %275 = vset.pattern.permute.xlu0 0
  %276 = vperm.xlu0 %275, %v246
  %v277 = vpop.permute.xlu0 %276
  %278 = vset.pattern.permute.xlu0 0
  %279 = vperm.xlu0 %278, %v247
  %v280 = vpop.permute.xlu0 %279
  %281 = vset.pattern.permute.xlu0 0
  %282 = vperm.xlu0 %281, %v248
  %v283 = vpop.permute.xlu0 %282
  %284 = vset.pattern.permute.xlu0 0
  %285 = vperm.xlu0 %284, %v249
  %v286 = vpop.permute.xlu0 %285
  %287 = vset.pattern.permute.xlu0 0
  %288 = vperm.xlu0 %287, %v250
  %v289 = vpop.permute.xlu0 %288
  %290 = vset.pattern.permute.xlu0 0
  %291 = vperm.xlu0 %290, %v251
  %v292 = vpop.permute.xlu0 %291
  %293 = vset.pattern.permute.xlu0 0
  %294 = vperm.xlu0 %293, %v252
  %v295 = vpop.permute.xlu0 %294
  %296 = vset.pattern.permute.xlu0 0
  %297 = vperm.xlu0 %296, %v253
  %v298 = vpop.permute.xlu0 %297
  %299 = vset.pattern.permute.xlu0 0
  %300 = vperm.xlu0 %299, %v254
  %v301 = vpop.permute.xlu0 %300
  %302 = vset.pattern.permute.xlu0 0
  %303 = vperm.xlu0 %302, %v255
  %v304 = vpop.permute.xlu0 %303
  %v305 = vlaneseq
  %v306 = vshrl.u32 %v305, 7
  %v307 = vsub.s32 0, %v306
  %v308 = vrot.slane %v256, %v307
  %vm309 = vcmp.eq.s32.totalorder %v259, %v308
  %vm310 = vcmp.eq.s32.totalorder %v262, %v308
  %vm311 = vcmp.eq.s32.totalorder %v265, %v308
  %vm312 = vcmp.eq.s32.totalorder %v268, %v308
  %vm313 = vcmp.eq.s32.totalorder %v271, %v308
  %vm314 = vcmp.eq.s32.totalorder %v274, %v308
  %vm315 = vcmp.eq.s32.totalorder %v277, %v308
  %vm316 = vcmp.eq.s32.totalorder %v280, %v308
  %vm317 = vcmp.eq.s32.totalorder %v283, %v308
  %vm318 = vcmp.eq.s32.totalorder %v286, %v308
  %vm319 = vcmp.eq.s32.totalorder %v289, %v308
  %vm320 = vcmp.eq.s32.totalorder %v292, %v308
  %vm321 = vcmp.eq.s32.totalorder %v295, %v308
  %vm322 = vcmp.eq.s32.totalorder %v298, %v308
  %vm323 = vcmp.eq.s32.totalorder %v301, %v308
  %vm324 = vcmp.eq.s32.totalorder %v304, %v308
  %v325 = vlaneseq
  %v326 = vand.u32 %v325, 127
  %vm327 = vcmp.lt.s32.totalorder %v326, 8
  %v328 = vsel %vm327, 1, 0
  %vm329 = vcmp.eq.s32.totalorder %v328, 1
  %vm330 = vmand %vm309, %vm329
  %vm331 = vmand %vm310, %vm329
  %vm332 = vmand %vm311, %vm329
  %vm333 = vmand %vm312, %vm329
  %vm334 = vmand %vm313, %vm329
  %vm335 = vmand %vm314, %vm329
  %vm336 = vmand %vm315, %vm329
  %vm337 = vmand %vm316, %vm329
  %vm338 = vmand %vm317, %vm329
  %vm339 = vmand %vm318, %vm329
  %vm340 = vmand %vm319, %vm329
  %vm341 = vmand %vm320, %vm329
  %vm342 = vmand %vm321, %vm329
  %vm343 = vmand %vm322, %vm329
  %vm344 = vmand %vm323, %vm329
  %vm345 = vmand %vm324, %vm329
  %vm346 = vmxor %vm309, 1
  %vm347 = vmxor %vm310, 1
  %vm348 = vmxor %vm311, 1
  %vm349 = vmxor %vm312, 1
  %vm350 = vmxor %vm313, 1
  %vm351 = vmxor %vm314, 1
  %vm352 = vmxor %vm315, 1
  %vm353 = vmxor %vm316, 1
  %vm354 = vmxor %vm317, 1
  %vm355 = vmxor %vm318, 1
  %vm356 = vmxor %vm319, 1
  %vm357 = vmxor %vm320, 1
  %vm358 = vmxor %vm321, 1
  %vm359 = vmxor %vm322, 1
  %vm360 = vmxor %vm323, 1
  %vm361 = vmxor %vm324, 1
  %vm362 = vmand %vm346, %vm329
  %vm363 = vmand %vm347, %vm329
  %vm364 = vmand %vm348, %vm329
  %vm365 = vmand %vm349, %vm329
  %vm366 = vmand %vm350, %vm329
  %vm367 = vmand %vm351, %vm329
  %vm368 = vmand %vm352, %vm329
  %vm369 = vmand %vm353, %vm329
  %vm370 = vmand %vm354, %vm329
  %vm371 = vmand %vm355, %vm329
  %vm372 = vmand %vm356, %vm329
  %vm373 = vmand %vm357, %vm329
  %vm374 = vmand %vm358, %vm329
  %vm375 = vmand %vm359, %vm329
  %vm376 = vmand %vm360, %vm329
  %vm377 = vmand %vm361, %vm329
  %v378 = vsel %vm330, %v224, -1e+30
  %v379 = vsel %vm331, %v225, -1e+30
  %v380 = vsel %vm332, %v226, -1e+30
  %v381 = vsel %vm333, %v227, -1e+30
  %v382 = vsel %vm334, %v228, -1e+30
  %v383 = vsel %vm335, %v229, -1e+30
  %v384 = vsel %vm336, %v230, -1e+30
  %v385 = vsel %vm337, %v231, -1e+30
  %v386 = vsel %vm338, %v232, -1e+30
  %v387 = vsel %vm339, %v233, -1e+30
  %v388 = vsel %vm340, %v234, -1e+30
  %v389 = vsel %vm341, %v235, -1e+30
  %v390 = vsel %vm342, %v236, -1e+30
  %v391 = vsel %vm343, %v237, -1e+30
  %v392 = vsel %vm344, %v238, -1e+30
  %v393 = vsel %vm345, %v239, -1e+30
  %394 = vmax.xlane.f32.xlu0 %v378
  %v395 = vpop.xlane.xlu0 %394
  %396 = vmax.xlane.f32.xlu0 %v379
  %v397 = vpop.xlane.xlu0 %396
  %398 = vmax.xlane.f32.xlu0 %v380
  %v399 = vpop.xlane.xlu0 %398
  %400 = vmax.xlane.f32.xlu0 %v381
  %v401 = vpop.xlane.xlu0 %400
  %402 = vmax.xlane.f32.xlu0 %v382
  %v403 = vpop.xlane.xlu0 %402
  %404 = vmax.xlane.f32.xlu0 %v383
  %v405 = vpop.xlane.xlu0 %404
  %406 = vmax.xlane.f32.xlu0 %v384
  %v407 = vpop.xlane.xlu0 %406
  %408 = vmax.xlane.f32.xlu0 %v385
  %v409 = vpop.xlane.xlu0 %408
  %410 = vmax.xlane.f32.xlu0 %v386
  %v411 = vpop.xlane.xlu0 %410
  %412 = vmax.xlane.f32.xlu0 %v387
  %v413 = vpop.xlane.xlu0 %412
  %414 = vmax.xlane.f32.xlu0 %v388
  %v415 = vpop.xlane.xlu0 %414
  %416 = vmax.xlane.f32.xlu0 %v389
  %v417 = vpop.xlane.xlu0 %416
  %418 = vmax.xlane.f32.xlu0 %v390
  %v419 = vpop.xlane.xlu0 %418
  %420 = vmax.xlane.f32.xlu0 %v391
  %v421 = vpop.xlane.xlu0 %420
  %422 = vmax.xlane.f32.xlu0 %v392
  %v423 = vpop.xlane.xlu0 %422
  %424 = vmax.xlane.f32.xlu0 %v393
  %v425 = vpop.xlane.xlu0 %424
  %v426 = vsel %vm362, %v224, 1e+30
  %v427 = vsel %vm363, %v225, 1e+30
  %v428 = vsel %vm364, %v226, 1e+30
  %v429 = vsel %vm365, %v227, 1e+30
  %v430 = vsel %vm366, %v228, 1e+30
  %v431 = vsel %vm367, %v229, 1e+30
  %v432 = vsel %vm368, %v230, 1e+30
  %v433 = vsel %vm369, %v231, 1e+30
  %v434 = vsel %vm370, %v232, 1e+30
  %v435 = vsel %vm371, %v233, 1e+30
  %v436 = vsel %vm372, %v234, 1e+30
  %v437 = vsel %vm373, %v235, 1e+30
  %v438 = vsel %vm374, %v236, 1e+30
  %v439 = vsel %vm375, %v237, 1e+30
  %v440 = vsel %vm376, %v238, 1e+30
  %v441 = vsel %vm377, %v239, 1e+30
  %442 = vmin.xlane.f32.xlu0 %v426
  %v443 = vpop.xlane.xlu0 %442
  %444 = vmin.xlane.f32.xlu0 %v427
  %v445 = vpop.xlane.xlu0 %444
  %446 = vmin.xlane.f32.xlu0 %v428
  %v447 = vpop.xlane.xlu0 %446
  %448 = vmin.xlane.f32.xlu0 %v429
  %v449 = vpop.xlane.xlu0 %448
  %450 = vmin.xlane.f32.xlu0 %v430
  %v451 = vpop.xlane.xlu0 %450
  %452 = vmin.xlane.f32.xlu0 %v431
  %v453 = vpop.xlane.xlu0 %452
  %454 = vmin.xlane.f32.xlu0 %v432
  %v455 = vpop.xlane.xlu0 %454
  %456 = vmin.xlane.f32.xlu0 %v433
  %v457 = vpop.xlane.xlu0 %456
  %458 = vmin.xlane.f32.xlu0 %v434
  %v459 = vpop.xlane.xlu0 %458
  %460 = vmin.xlane.f32.xlu0 %v435
  %v461 = vpop.xlane.xlu0 %460
  %462 = vmin.xlane.f32.xlu0 %v436
  %v463 = vpop.xlane.xlu0 %462
  %464 = vmin.xlane.f32.xlu0 %v437
  %v465 = vpop.xlane.xlu0 %464
  %466 = vmin.xlane.f32.xlu0 %v438
  %v467 = vpop.xlane.xlu0 %466
  %468 = vmin.xlane.f32.xlu0 %v439
  %v469 = vpop.xlane.xlu0 %468
  %470 = vmin.xlane.f32.xlu0 %v440
  %v471 = vpop.xlane.xlu0 %470
  %472 = vmin.xlane.f32.xlu0 %v441
  %v473 = vpop.xlane.xlu0 %472
  %v474 = vld [vmem:[%s1] sm:$0xff]
  %v475 = vld [vmem:[%s1 + $0x8] sm:$0xff]
  %v476 = vld [vmem:[%s1 + $0x10] sm:$0xff]
  %v477 = vld [vmem:[%s1 + $0x18] sm:$0xff]
  %v478 = vld [vmem:[%s1 + $0x20] sm:$0xff]
  %v479 = vld [vmem:[%s1 + $0x28] sm:$0xff]
  %v480 = vld [vmem:[%s1 + $0x30] sm:$0xff]
  %v481 = vld [vmem:[%s1 + $0x38] sm:$0xff]
  %v482 = vld [vmem:[%s1 + $0x40] sm:$0xff]
  %v483 = vld [vmem:[%s1 + $0x48] sm:$0xff]
  %v484 = vld [vmem:[%s1 + $0x50] sm:$0xff]
  %v485 = vld [vmem:[%s1 + $0x58] sm:$0xff]
  %v486 = vld [vmem:[%s1 + $0x60] sm:$0xff]
  %v487 = vld [vmem:[%s1 + $0x68] sm:$0xff]
  %v488 = vld [vmem:[%s1 + $0x70] sm:$0xff]
  %v489 = vld [vmem:[%s1 + $0x78] sm:$0xff]
  %v490 = vadd.f32 %v395, %v474
  %v491 = vadd.f32 %v397, %v475
  %v492 = vadd.f32 %v399, %v476
  %v493 = vadd.f32 %v401, %v477
  %v494 = vadd.f32 %v403, %v478
  %v495 = vadd.f32 %v405, %v479
  %v496 = vadd.f32 %v407, %v480
  %v497 = vadd.f32 %v409, %v481
  %v498 = vadd.f32 %v411, %v482
  %v499 = vadd.f32 %v413, %v483
  %v500 = vadd.f32 %v415, %v484
  %v501 = vadd.f32 %v417, %v485
  %v502 = vadd.f32 %v419, %v486
  %v503 = vadd.f32 %v421, %v487
  %v504 = vadd.f32 %v423, %v488
  %v505 = vadd.f32 %v425, %v489
  %v506 = vmax.f32 %v490, 1e-12
  %v507 = vmax.f32 %v491, 1e-12
  %v508 = vmax.f32 %v492, 1e-12
  %v509 = vmax.f32 %v493, 1e-12
  %v510 = vmax.f32 %v494, 1e-12
  %v511 = vmax.f32 %v495, 1e-12
  %v512 = vmax.f32 %v496, 1e-12
  %v513 = vmax.f32 %v497, 1e-12
  %v514 = vmax.f32 %v498, 1e-12
  %v515 = vmax.f32 %v499, 1e-12
  %v516 = vmax.f32 %v500, 1e-12
  %v517 = vmax.f32 %v501, 1e-12
  %v518 = vmax.f32 %v502, 1e-12
  %v519 = vmax.f32 %v503, 1e-12
  %v520 = vmax.f32 %v504, 1e-12
  %v521 = vmax.f32 %v505, 1e-12
  %v522 = vrsqrt.pop %v506
  %v523 = vmul.f32 %v506, %v522
  %vm524 = vcmp.eq.f32.partialorder %v506, inf
  %v525 = vsel %vm524, %v506, %v523
  %vm526 = vcmp.eq.f32.partialorder %v506, 0.0
  %v527 = vand.u32 %v506, 2147483648
  %v528 = vsel %vm526, %v527, %v525
  %v529 = vrsqrt.pop %v507
  %v530 = vmul.f32 %v507, %v529
  %vm531 = vcmp.eq.f32.partialorder %v507, inf
  %v532 = vsel %vm531, %v507, %v530
  %vm533 = vcmp.eq.f32.partialorder %v507, 0.0
  %v534 = vand.u32 %v507, 2147483648
  %v535 = vsel %vm533, %v534, %v532
  %v536 = vrsqrt.pop %v508
  %v537 = vmul.f32 %v508, %v536
  %vm538 = vcmp.eq.f32.partialorder %v508, inf
  %v539 = vsel %vm538, %v508, %v537
  %vm540 = vcmp.eq.f32.partialorder %v508, 0.0
  %v541 = vand.u32 %v508, 2147483648
  %v542 = vsel %vm540, %v541, %v539
  %v543 = vrsqrt.pop %v509
  %v544 = vmul.f32 %v509, %v543
  %vm545 = vcmp.eq.f32.partialorder %v509, inf
  %v546 = vsel %vm545, %v509, %v544
  %vm547 = vcmp.eq.f32.partialorder %v509, 0.0
  %v548 = vand.u32 %v509, 2147483648
  %v549 = vsel %vm547, %v548, %v546
  %v550 = vrsqrt.pop %v510
  %v551 = vmul.f32 %v510, %v550
  %vm552 = vcmp.eq.f32.partialorder %v510, inf
  %v553 = vsel %vm552, %v510, %v551
  %vm554 = vcmp.eq.f32.partialorder %v510, 0.0
  %v555 = vand.u32 %v510, 2147483648
  %v556 = vsel %vm554, %v555, %v553
  %v557 = vrsqrt.pop %v511
  %v558 = vmul.f32 %v511, %v557
  %vm559 = vcmp.eq.f32.partialorder %v511, inf
  %v560 = vsel %vm559, %v511, %v558
  %vm561 = vcmp.eq.f32.partialorder %v511, 0.0
  %v562 = vand.u32 %v511, 2147483648
  %v563 = vsel %vm561, %v562, %v560
  %v564 = vrsqrt.pop %v512
  %v565 = vmul.f32 %v512, %v564
  %vm566 = vcmp.eq.f32.partialorder %v512, inf
  %v567 = vsel %vm566, %v512, %v565
  %vm568 = vcmp.eq.f32.partialorder %v512, 0.0
  %v569 = vand.u32 %v512, 2147483648
  %v570 = vsel %vm568, %v569, %v567
  %v571 = vrsqrt.pop %v513
  %v572 = vmul.f32 %v513, %v571
  %vm573 = vcmp.eq.f32.partialorder %v513, inf
  %v574 = vsel %vm573, %v513, %v572
  %vm575 = vcmp.eq.f32.partialorder %v513, 0.0
  %v576 = vand.u32 %v513, 2147483648
  %v577 = vsel %vm575, %v576, %v574
  %v578 = vrsqrt.pop %v514
  %v579 = vmul.f32 %v514, %v578
  %vm580 = vcmp.eq.f32.partialorder %v514, inf
  %v581 = vsel %vm580, %v514, %v579
  %vm582 = vcmp.eq.f32.partialorder %v514, 0.0
  %v583 = vand.u32 %v514, 2147483648
  %v584 = vsel %vm582, %v583, %v581
  %v585 = vrsqrt.pop %v515
  %v586 = vmul.f32 %v515, %v585
  %vm587 = vcmp.eq.f32.partialorder %v515, inf
  %v588 = vsel %vm587, %v515, %v586
  %vm589 = vcmp.eq.f32.partialorder %v515, 0.0
  %v590 = vand.u32 %v515, 2147483648
  %v591 = vsel %vm589, %v590, %v588
  %v592 = vrsqrt.pop %v516
  %v593 = vmul.f32 %v516, %v592
  %vm594 = vcmp.eq.f32.partialorder %v516, inf
  %v595 = vsel %vm594, %v516, %v593
  %vm596 = vcmp.eq.f32.partialorder %v516, 0.0
  %v597 = vand.u32 %v516, 2147483648
  %v598 = vsel %vm596, %v597, %v595
  %v599 = vrsqrt.pop %v517
  %v600 = vmul.f32 %v517, %v599
  %vm601 = vcmp.eq.f32.partialorder %v517, inf
  %v602 = vsel %vm601, %v517, %v600
  %vm603 = vcmp.eq.f32.partialorder %v517, 0.0
  %v604 = vand.u32 %v517, 2147483648
  %v605 = vsel %vm603, %v604, %v602
  %v606 = vrsqrt.pop %v518
  %v607 = vmul.f32 %v518, %v606
  %vm608 = vcmp.eq.f32.partialorder %v518, inf
  %v609 = vsel %vm608, %v518, %v607
  %vm610 = vcmp.eq.f32.partialorder %v518, 0.0
  %v611 = vand.u32 %v518, 2147483648
  %v612 = vsel %vm610, %v611, %v609
  %v613 = vrsqrt.pop %v519
  %v614 = vmul.f32 %v519, %v613
  %vm615 = vcmp.eq.f32.partialorder %v519, inf
  %v616 = vsel %vm615, %v519, %v614
  %vm617 = vcmp.eq.f32.partialorder %v519, 0.0
  %v618 = vand.u32 %v519, 2147483648
  %v619 = vsel %vm617, %v618, %v616
  %v620 = vrsqrt.pop %v520
  %v621 = vmul.f32 %v520, %v620
  %vm622 = vcmp.eq.f32.partialorder %v520, inf
  %v623 = vsel %vm622, %v520, %v621
  %vm624 = vcmp.eq.f32.partialorder %v520, 0.0
  %v625 = vand.u32 %v520, 2147483648
  %v626 = vsel %vm624, %v625, %v623
  %v627 = vrsqrt.pop %v521
  %v628 = vmul.f32 %v521, %v627
  %vm629 = vcmp.eq.f32.partialorder %v521, inf
  %v630 = vsel %vm629, %v521, %v628
  %vm631 = vcmp.eq.f32.partialorder %v521, 0.0
  %v632 = vand.u32 %v521, 2147483648
  %v633 = vsel %vm631, %v632, %v630
  %v634 = vadd.f32 %v443, %v474
  %v635 = vadd.f32 %v445, %v475
  %v636 = vadd.f32 %v447, %v476
  %v637 = vadd.f32 %v449, %v477
  %v638 = vadd.f32 %v451, %v478
  %v639 = vadd.f32 %v453, %v479
  %v640 = vadd.f32 %v455, %v480
  %v641 = vadd.f32 %v457, %v481
  %v642 = vadd.f32 %v459, %v482
  %v643 = vadd.f32 %v461, %v483
  %v644 = vadd.f32 %v463, %v484
  %v645 = vadd.f32 %v465, %v485
  %v646 = vadd.f32 %v467, %v486
  %v647 = vadd.f32 %v469, %v487
  %v648 = vadd.f32 %v471, %v488
  %v649 = vadd.f32 %v473, %v489
  %v650 = vmax.f32 %v634, 1e-12
  %v651 = vmax.f32 %v635, 1e-12
  %v652 = vmax.f32 %v636, 1e-12
  %v653 = vmax.f32 %v637, 1e-12
  %v654 = vmax.f32 %v638, 1e-12
  %v655 = vmax.f32 %v639, 1e-12
  %v656 = vmax.f32 %v640, 1e-12
  %v657 = vmax.f32 %v641, 1e-12
  %v658 = vmax.f32 %v642, 1e-12
  %v659 = vmax.f32 %v643, 1e-12
  %v660 = vmax.f32 %v644, 1e-12
  %v661 = vmax.f32 %v645, 1e-12
  %v662 = vmax.f32 %v646, 1e-12
  %v663 = vmax.f32 %v647, 1e-12
  %v664 = vmax.f32 %v648, 1e-12
  %v665 = vmax.f32 %v649, 1e-12
  %v666 = vrsqrt.pop %v650
  %v667 = vmul.f32 %v650, %v666
  %vm668 = vcmp.eq.f32.partialorder %v650, inf
  %v669 = vsel %vm668, %v650, %v667
  %vm670 = vcmp.eq.f32.partialorder %v650, 0.0
  %v671 = vand.u32 %v650, 2147483648
  %v672 = vsel %vm670, %v671, %v669
  %v673 = vrsqrt.pop %v651
  %v674 = vmul.f32 %v651, %v673
  %vm675 = vcmp.eq.f32.partialorder %v651, inf
  %v676 = vsel %vm675, %v651, %v674
  %vm677 = vcmp.eq.f32.partialorder %v651, 0.0
  %v678 = vand.u32 %v651, 2147483648
  %v679 = vsel %vm677, %v678, %v676
  %v680 = vrsqrt.pop %v652
  %v681 = vmul.f32 %v652, %v680
  %vm682 = vcmp.eq.f32.partialorder %v652, inf
  %v683 = vsel %vm682, %v652, %v681
  %vm684 = vcmp.eq.f32.partialorder %v652, 0.0
  %v685 = vand.u32 %v652, 2147483648
  %v686 = vsel %vm684, %v685, %v683
  %v687 = vrsqrt.pop %v653
  %v688 = vmul.f32 %v653, %v687
  %vm689 = vcmp.eq.f32.partialorder %v653, inf
  %v690 = vsel %vm689, %v653, %v688
  %vm691 = vcmp.eq.f32.partialorder %v653, 0.0
  %v692 = vand.u32 %v653, 2147483648
  %v693 = vsel %vm691, %v692, %v690
  %v694 = vrsqrt.pop %v654
  %v695 = vmul.f32 %v654, %v694
  %vm696 = vcmp.eq.f32.partialorder %v654, inf
  %v697 = vsel %vm696, %v654, %v695
  %vm698 = vcmp.eq.f32.partialorder %v654, 0.0
  %v699 = vand.u32 %v654, 2147483648
  %v700 = vsel %vm698, %v699, %v697
  %v701 = vrsqrt.pop %v655
  %v702 = vmul.f32 %v655, %v701
  %vm703 = vcmp.eq.f32.partialorder %v655, inf
  %v704 = vsel %vm703, %v655, %v702
  %vm705 = vcmp.eq.f32.partialorder %v655, 0.0
  %v706 = vand.u32 %v655, 2147483648
  %v707 = vsel %vm705, %v706, %v704
  %v708 = vrsqrt.pop %v656
  %v709 = vmul.f32 %v656, %v708
  %vm710 = vcmp.eq.f32.partialorder %v656, inf
  %v711 = vsel %vm710, %v656, %v709
  %vm712 = vcmp.eq.f32.partialorder %v656, 0.0
  %v713 = vand.u32 %v656, 2147483648
  %v714 = vsel %vm712, %v713, %v711
  %v715 = vrsqrt.pop %v657
  %v716 = vmul.f32 %v657, %v715
  %vm717 = vcmp.eq.f32.partialorder %v657, inf
  %v718 = vsel %vm717, %v657, %v716
  %vm719 = vcmp.eq.f32.partialorder %v657, 0.0
  %v720 = vand.u32 %v657, 2147483648
  %v721 = vsel %vm719, %v720, %v718
  %v722 = vrsqrt.pop %v658
  %v723 = vmul.f32 %v658, %v722
  %vm724 = vcmp.eq.f32.partialorder %v658, inf
  %v725 = vsel %vm724, %v658, %v723
  %vm726 = vcmp.eq.f32.partialorder %v658, 0.0
  %v727 = vand.u32 %v658, 2147483648
  %v728 = vsel %vm726, %v727, %v725
  %v729 = vrsqrt.pop %v659
  %v730 = vmul.f32 %v659, %v729
  %vm731 = vcmp.eq.f32.partialorder %v659, inf
  %v732 = vsel %vm731, %v659, %v730
  %vm733 = vcmp.eq.f32.partialorder %v659, 0.0
  %v734 = vand.u32 %v659, 2147483648
  %v735 = vsel %vm733, %v734, %v732
  %v736 = vrsqrt.pop %v660
  %v737 = vmul.f32 %v660, %v736
  %vm738 = vcmp.eq.f32.partialorder %v660, inf
  %v739 = vsel %vm738, %v660, %v737
  %vm740 = vcmp.eq.f32.partialorder %v660, 0.0
  %v741 = vand.u32 %v660, 2147483648
  %v742 = vsel %vm740, %v741, %v739
  %v743 = vrsqrt.pop %v661
  %v744 = vmul.f32 %v661, %v743
  %vm745 = vcmp.eq.f32.partialorder %v661, inf
  %v746 = vsel %vm745, %v661, %v744
  %vm747 = vcmp.eq.f32.partialorder %v661, 0.0
  %v748 = vand.u32 %v661, 2147483648
  %v749 = vsel %vm747, %v748, %v746
  %v750 = vrsqrt.pop %v662
  %v751 = vmul.f32 %v662, %v750
  %vm752 = vcmp.eq.f32.partialorder %v662, inf
  %v753 = vsel %vm752, %v662, %v751
  %vm754 = vcmp.eq.f32.partialorder %v662, 0.0
  %v755 = vand.u32 %v662, 2147483648
  %v756 = vsel %vm754, %v755, %v753
  %v757 = vrsqrt.pop %v663
  %v758 = vmul.f32 %v663, %v757
  %vm759 = vcmp.eq.f32.partialorder %v663, inf
  %v760 = vsel %vm759, %v663, %v758
  %vm761 = vcmp.eq.f32.partialorder %v663, 0.0
  %v762 = vand.u32 %v663, 2147483648
  %v763 = vsel %vm761, %v762, %v760
  %v764 = vrsqrt.pop %v664
  %v765 = vmul.f32 %v664, %v764
  %vm766 = vcmp.eq.f32.partialorder %v664, inf
  %v767 = vsel %vm766, %v664, %v765
  %vm768 = vcmp.eq.f32.partialorder %v664, 0.0
  %v769 = vand.u32 %v664, 2147483648
  %v770 = vsel %vm768, %v769, %v767
  %v771 = vrsqrt.pop %v665
  %v772 = vmul.f32 %v665, %v771
  %vm773 = vcmp.eq.f32.partialorder %v665, inf
  %v774 = vsel %vm773, %v665, %v772
  %vm775 = vcmp.eq.f32.partialorder %v665, 0.0
  %v776 = vand.u32 %v665, 2147483648
  %v777 = vsel %vm775, %v776, %v774
  %v778 = vlaneseq
  %v779 = vshrl.u32 %v778, 7
  %v780 = vadd.s32 %v779, 8
  %v781 = vadd.s32 %v779, 16
  %v782 = vadd.s32 %v779, 24
  %v783 = vadd.s32 %v779, 32
  %v784 = vadd.s32 %v779, 40
  %v785 = vadd.s32 %v779, 48
  %v786 = vadd.s32 %v779, 56
  %v787 = vadd.s32 %v779, 64
  %v788 = vadd.s32 %v779, 72
  %v789 = vadd.s32 %v779, 80
  %v790 = vadd.s32 %v779, 88
  %v791 = vadd.s32 %v779, 96
  %v792 = vadd.s32 %v779, 104
  %v793 = vadd.s32 %v779, 112
  %v794 = vadd.s32 %v779, 120
  %v795 = vstv %s22
  %v796 = vadd.s32 %v795, %v779
  %v797 = vadd.s32 %v795, %v780
  %v798 = vadd.s32 %v795, %v781
  %v799 = vadd.s32 %v795, %v782
  %v800 = vadd.s32 %v795, %v783
  %v801 = vadd.s32 %v795, %v784
  %v802 = vadd.s32 %v795, %v785
  %v803 = vadd.s32 %v795, %v786
  %v804 = vadd.s32 %v795, %v787
  %v805 = vadd.s32 %v795, %v788
  %v806 = vadd.s32 %v795, %v789
  %v807 = vadd.s32 %v795, %v790
  %v808 = vadd.s32 %v795, %v791
  %v809 = vadd.s32 %v795, %v792
  %v810 = vadd.s32 %v795, %v793
  %v811 = vadd.s32 %v795, %v794
  %vm812 = vcmp.lt.s32.totalorder %v796, 8
  %vm813 = vcmp.lt.s32.totalorder %v797, 8
  %vm814 = vcmp.lt.s32.totalorder %v798, 8
  %vm815 = vcmp.lt.s32.totalorder %v799, 8
  %vm816 = vcmp.lt.s32.totalorder %v800, 8
  %vm817 = vcmp.lt.s32.totalorder %v801, 8
  %vm818 = vcmp.lt.s32.totalorder %v802, 8
  %vm819 = vcmp.lt.s32.totalorder %v803, 8
  %vm820 = vcmp.lt.s32.totalorder %v804, 8
  %vm821 = vcmp.lt.s32.totalorder %v805, 8
  %vm822 = vcmp.lt.s32.totalorder %v806, 8
  %vm823 = vcmp.lt.s32.totalorder %v807, 8
  %vm824 = vcmp.lt.s32.totalorder %v808, 8
  %vm825 = vcmp.lt.s32.totalorder %v809, 8
  %vm826 = vcmp.lt.s32.totalorder %v810, 8
  %vm827 = vcmp.lt.s32.totalorder %v811, 8
  %v828 = vsub.f32 %v528, %v672
  %v829 = vsub.f32 %v535, %v679
  %v830 = vsub.f32 %v542, %v686
  %v831 = vsub.f32 %v549, %v693
  %v832 = vsub.f32 %v556, %v700
  %v833 = vsub.f32 %v563, %v707
  %v834 = vsub.f32 %v570, %v714
  %v835 = vsub.f32 %v577, %v721
  %v836 = vsub.f32 %v584, %v728
  %v837 = vsub.f32 %v591, %v735
  %v838 = vsub.f32 %v598, %v742
  %v839 = vsub.f32 %v605, %v749
  %v840 = vsub.f32 %v612, %v756
  %v841 = vsub.f32 %v619, %v763
  %v842 = vsub.f32 %v626, %v770
  %v843 = vsub.f32 %v633, %v777
  %v844 = vadd.f32 %v828, 0.3
  %v845 = vadd.f32 %v829, 0.3
  %v846 = vadd.f32 %v830, 0.3
  %v847 = vadd.f32 %v831, 0.3
  %v848 = vadd.f32 %v832, 0.3
  %v849 = vadd.f32 %v833, 0.3
  %v850 = vadd.f32 %v834, 0.3
  %v851 = vadd.f32 %v835, 0.3
  %v852 = vadd.f32 %v836, 0.3
  %v853 = vadd.f32 %v837, 0.3
  %v854 = vadd.f32 %v838, 0.3
  %v855 = vadd.f32 %v839, 0.3
  %v856 = vadd.f32 %v840, 0.3
  %v857 = vadd.f32 %v841, 0.3
  %v858 = vadd.f32 %v842, 0.3
  %v859 = vadd.f32 %v843, 0.3
  %v860 = vmax.f32 %v844, 0.0
  %v861 = vmax.f32 %v845, 0.0
  %v862 = vmax.f32 %v846, 0.0
  %v863 = vmax.f32 %v847, 0.0
  %v864 = vmax.f32 %v848, 0.0
  %v865 = vmax.f32 %v849, 0.0
  %v866 = vmax.f32 %v850, 0.0
  %v867 = vmax.f32 %v851, 0.0
  %v868 = vmax.f32 %v852, 0.0
  %v869 = vmax.f32 %v853, 0.0
  %v870 = vmax.f32 %v854, 0.0
  %v871 = vmax.f32 %v855, 0.0
  %v872 = vmax.f32 %v856, 0.0
  %v873 = vmax.f32 %v857, 0.0
  %v874 = vmax.f32 %v858, 0.0
  %v875 = vmax.f32 %v859, 0.0
  %v876 = vsel %vm812, %v860, 0.0
  %v877 = vsel %vm813, %v861, 0.0
  %v878 = vsel %vm814, %v862, 0.0
  %v879 = vsel %vm815, %v863, 0.0
  %v880 = vsel %vm816, %v864, 0.0
  %v881 = vsel %vm817, %v865, 0.0
  %v882 = vsel %vm818, %v866, 0.0
  %v883 = vsel %vm819, %v867, 0.0
  %v884 = vsel %vm820, %v868, 0.0
  %v885 = vsel %vm821, %v869, 0.0
  %v886 = vsel %vm822, %v870, 0.0
  %v887 = vsel %vm823, %v871, 0.0
  %v888 = vsel %vm824, %v872, 0.0
  %v889 = vsel %vm825, %v873, 0.0
  %v890 = vsel %vm826, %v874, 0.0
  %v891 = vsel %vm827, %v875, 0.0
  %vm892 = vcmask 7168
  %893 = vst.msk [vmem:[%s5] sm:$0xff] %vm892, %v876
  %894 = vst.msk [vmem:[%s5 + $0x8] sm:$0xff] %vm892, %v877
  %895 = vst.msk [vmem:[%s5 + $0x10] sm:$0xff] %vm892, %v878
  %896 = vst.msk [vmem:[%s5 + $0x18] sm:$0xff] %vm892, %v879
  %897 = vst.msk [vmem:[%s5 + $0x20] sm:$0xff] %vm892, %v880
  %898 = vst.msk [vmem:[%s5 + $0x28] sm:$0xff] %vm892, %v881
  %899 = vst.msk [vmem:[%s5 + $0x30] sm:$0xff] %vm892, %v882
  %900 = vst.msk [vmem:[%s5 + $0x38] sm:$0xff] %vm892, %v883
  %901 = vst.msk [vmem:[%s5 + $0x40] sm:$0xff] %vm892, %v884
  %902 = vst.msk [vmem:[%s5 + $0x48] sm:$0xff] %vm892, %v885
  %903 = vst.msk [vmem:[%s5 + $0x50] sm:$0xff] %vm892, %v886
  %904 = vst.msk [vmem:[%s5 + $0x58] sm:$0xff] %vm892, %v887
  %905 = vst.msk [vmem:[%s5 + $0x60] sm:$0xff] %vm892, %v888
  %906 = vst.msk [vmem:[%s5 + $0x68] sm:$0xff] %vm892, %v889
  %907 = vst.msk [vmem:[%s5 + $0x70] sm:$0xff] %vm892, %v890
  %908 = vst.msk [vmem:[%s5 + $0x78] sm:$0xff] %vm892, %v891
  %vm909 = vcmp.ge.f32.partialorder %v672, %v528
  %vm910 = vcmp.ge.f32.partialorder %v679, %v535
  %vm911 = vcmp.ge.f32.partialorder %v686, %v542
  %vm912 = vcmp.ge.f32.partialorder %v693, %v549
  %vm913 = vcmp.ge.f32.partialorder %v700, %v556
  %vm914 = vcmp.ge.f32.partialorder %v707, %v563
  %vm915 = vcmp.ge.f32.partialorder %v714, %v570
  %vm916 = vcmp.ge.f32.partialorder %v721, %v577
  %vm917 = vcmp.ge.f32.partialorder %v728, %v584
  %vm918 = vcmp.ge.f32.partialorder %v735, %v591
  %vm919 = vcmp.ge.f32.partialorder %v742, %v598
  %vm920 = vcmp.ge.f32.partialorder %v749, %v605
  %vm921 = vcmp.ge.f32.partialorder %v756, %v612
  %vm922 = vcmp.ge.f32.partialorder %v763, %v619
  %vm923 = vcmp.ge.f32.partialorder %v770, %v626
  %vm924 = vcmp.ge.f32.partialorder %v777, %v633
  %vm925 = vmand %vm812, %vm909
  %vm926 = vmand %vm813, %vm910
  %vm927 = vmand %vm814, %vm911
  %vm928 = vmand %vm815, %vm912
  %vm929 = vmand %vm816, %vm913
  %vm930 = vmand %vm817, %vm914
  %vm931 = vmand %vm818, %vm915
  %vm932 = vmand %vm819, %vm916
  %vm933 = vmand %vm820, %vm917
  %vm934 = vmand %vm821, %vm918
  %vm935 = vmand %vm822, %vm919
  %vm936 = vmand %vm823, %vm920
  %vm937 = vmand %vm824, %vm921
  %vm938 = vmand %vm825, %vm922
  %vm939 = vmand %vm826, %vm923
  %vm940 = vmand %vm827, %vm924
  %v941 = vsel %vm925, 1, 0
  %v942 = vsel %vm926, 1, 0
  %v943 = vsel %vm927, 1, 0
  %v944 = vsel %vm928, 1, 0
  %v945 = vsel %vm929, 1, 0
  %v946 = vsel %vm930, 1, 0
  %v947 = vsel %vm931, 1, 0
  %v948 = vsel %vm932, 1, 0
  %v949 = vsel %vm933, 1, 0
  %v950 = vsel %vm934, 1, 0
  %v951 = vsel %vm935, 1, 0
  %v952 = vsel %vm936, 1, 0
  %v953 = vsel %vm937, 1, 0
  %v954 = vsel %vm938, 1, 0
  %v955 = vsel %vm939, 1, 0
  %v956 = vsel %vm940, 1, 0
  %957 = vst.msk [vmem:[%s6] sm:$0xff] %vm892, %v941
  %958 = vst.msk [vmem:[%s6 + $0x8] sm:$0xff] %vm892, %v942
  %959 = vst.msk [vmem:[%s6 + $0x10] sm:$0xff] %vm892, %v943
  %960 = vst.msk [vmem:[%s6 + $0x18] sm:$0xff] %vm892, %v944
  %961 = vst.msk [vmem:[%s6 + $0x20] sm:$0xff] %vm892, %v945
  %962 = vst.msk [vmem:[%s6 + $0x28] sm:$0xff] %vm892, %v946
  %963 = vst.msk [vmem:[%s6 + $0x30] sm:$0xff] %vm892, %v947
  %964 = vst.msk [vmem:[%s6 + $0x38] sm:$0xff] %vm892, %v948
  %965 = vst.msk [vmem:[%s6 + $0x40] sm:$0xff] %vm892, %v949
  %966 = vst.msk [vmem:[%s6 + $0x48] sm:$0xff] %vm892, %v950
  %967 = vst.msk [vmem:[%s6 + $0x50] sm:$0xff] %vm892, %v951
  %968 = vst.msk [vmem:[%s6 + $0x58] sm:$0xff] %vm892, %v952
  %969 = vst.msk [vmem:[%s6 + $0x60] sm:$0xff] %vm892, %v953
  %970 = vst.msk [vmem:[%s6 + $0x68] sm:$0xff] %vm892, %v954
  %971 = vst.msk [vmem:[%s6 + $0x70] sm:$0xff] %vm892, %v955
  %972 = vst.msk [vmem:[%s6 + $0x78] sm:$0xff] %vm892, %v956
  // Predicated region
  $region22: #{tpu_custom_call.1} parent=0 // pred_check
    _
  $region23: #{tpu_custom_call.1} parent=0 // pred_check_branch
    %974 = sbr.rel (0) target = $region25
  $region24: #{tpu_custom_call.1} parent=0 // pred_region
    _
  $region25: #{tpu_custom_call.1} parent=0 // pred_fallthru
    _
  // Predicated region
  $region26: #{tpu_custom_call.1} parent=0 // pred_check
    _
  $region27: #{tpu_custom_call.1} parent=0 // pred_check_branch
    %976 = sbr.rel (0) target = $region29
  $region28: #{tpu_custom_call.1} parent=0 // pred_region
    _
  $region29: #{tpu_custom_call.1} parent=0 // pred_fallthru
    _
  // Predicated region
  $region30: #{tpu_custom_call.1} parent=0 // pred_check
    _
  $region31: #{tpu_custom_call.1} parent=0 // pred_check_branch
    %978 = sbr.rel (0) target = $region33
  $region32: #{tpu_custom_call.1} parent=0 // pred_region
    _
  $region33: #{tpu_custom_call.1} parent=0 // pred_fallthru
    _
  // Predicated region
  $region34: #{tpu_custom_call.1} parent=0 // pred_check
    _
  $region35: #{tpu_custom_call.1} parent=0 // pred_check_branch
    %980 = sbr.rel (0) target = $region37
  $region36: #{tpu_custom_call.1} parent=0 // pred_region
    _
  $region37: #{tpu_custom_call.1} parent=0 // pred_fallthru
    _

</llo_original>
